<compile_context>
chip_gen: v5e
topology: v5e:2x2
jax: 0.10.0
libtpu: 0.0.40
codegen_flags: <defaults>
</compile_context>

<pallas_src>
import jax
import jax.numpy as jnp
from jax.experimental import pallas as pl
from jax.experimental.pallas import tpu as pltpu


def simple_g_kernel(x_ref, w1_ref, b1_ref, w2_ref, b2_ref,
                    w3_ref, b3_ref, w4_ref, b4_ref, o_ref):
    # x_ref: (1, tb)  -- batch on lanes.
    x = x_ref[...]

    # ebd: Linear(1, 20). K=1 contraction -> VPU outer product:
    #   (20, 1) * (1, tb) + (20, 1)  ->  (20, tb)
    h = w1_ref[...] * x + b1_ref[...]

    # net[0..1]: Linear(20, 30) + ReLU   ->  (30, 20) @ (20, tb)
    h = jnp.maximum(
        jnp.dot(w2_ref[...], h, preferred_element_type=jnp.float32) + b2_ref[...],
        0.0)

    # net[2..3]: Linear(30, 30) + ReLU   ->  (30, 30) @ (30, tb)
    h = jnp.maximum(
        jnp.dot(w3_ref[...], h, preferred_element_type=jnp.float32) + b3_ref[...],
        0.0)

    # net[4]: Linear(30, 1)              ->  (1, 30) @ (30, tb)  (lane-dense output row)
    out = jnp.dot(w4_ref[...], h, preferred_element_type=jnp.float32) + b4_ref[...]
    o_ref[...] = out.astype(o_ref.dtype)


def simple_g_forward(noise, x, params, *, block_b=None):
    """x: (B, 1) float32. Returns (B, 1). `noise` is unused (matches PyTorch forward)."""
    del noise
    (w1, b1, w2, b2, w3, b3, w4, b4) = params
    B = x.shape[0]

    # Pure reshape (last dim is 1): batch moves onto the lane axis.
    x_t = x.reshape(1, B)

    # Fixed lane-multiple batch tile; full-array tile for small B (still a legal block).
    if block_b is None:
        block_b = 1024  # multiple of 128; ~120 KiB of live f32 intermediates per tile
    tb = B if B <= block_b else block_b
    grid = (pl.cdiv(B, tb),)

    # Constant index_map -> these tiny (padded-to-(8,128)) arrays are fetched once and
    # stay resident in VMEM across all grid steps.
    const_spec = lambda a: pl.BlockSpec(a.shape, lambda i: (0, 0))

    out_t = pl.pallas_call(
        simple_g_kernel,
        out_shape=jax.ShapeDtypeStruct((1, B), x.dtype),
        grid_spec=pltpu.PrefetchScalarGridSpec(
            num_scalar_prefetch=0,
            grid=grid,
            in_specs=[
                pl.BlockSpec((1, tb), lambda i: (0, i)),   # x tile: batch on lanes
                const_spec(w1), const_spec(b1),
                const_spec(w2), const_spec(b2),
                const_spec(w3), const_spec(b3),
                const_spec(w4), const_spec(b4),
            ],
            out_specs=pl.BlockSpec((1, tb), lambda i: (0, i)),
        ),
        compiler_params=pltpu.CompilerParams(
            dimension_semantics=("parallel",)),   # batch tiles shard across v7x's 2 TCs
    )(x_t, w1, b1, w2, b2, w3, b3, w4, b4)

    return out_t.reshape(B, 1)


def init_params(key):
    # Deterministic init mimicking PyTorch's U(-1/sqrt(fan_in), 1/sqrt(fan_in)).
    # Weights stored in PyTorch layout (out_features, in_features); biases (out_features, 1).
    dims = [(1, 20), (20, 30), (30, 30), (30, 1)]   # (fan_in, fan_out)
    params = []
    for (fan_in, fan_out) in dims:
        key, kw, kb = jax.random.split(key, 3)
        bound = 1.0 / jnp.sqrt(jnp.float32(fan_in))
        w = jax.random.uniform(kw, (fan_out, fan_in), jnp.float32, -bound, bound)
        b = jax.random.uniform(kb, (fan_out, 1), jnp.float32, -bound, bound)
        params.extend([w, b])
    return tuple(params)


def reference_forward(noise, x, params):
    del noise
    (w1, b1, w2, b2, w3, b3, w4, b4) = params
    h = x @ w1.T + b1.T
    h = jnp.maximum(h @ w2.T + b2.T, 0.0)
    h = jnp.maximum(h @ w3.T + b3.T, 0.0)
    return h @ w4.T + b4.T


if __name__ == "__main__":
    key = jax.random.PRNGKey(0)
    k_params, k_x, k_noise, k_x2 = jax.random.split(key, 4)

    params = init_params(k_params)

    # Small check (matches the module: input feature dim = 1).
    B = 8
    x = jax.random.normal(k_x, (B, 1), jnp.float32)
    noise = jax.random.normal(k_noise, (B, 4), jnp.float32)  # unused by forward

    out = simple_g_forward(noise, x, params)
    out = jax.block_until_ready(out)
    ref = reference_forward(noise, x, params)
    assert out.shape == (B, 1)
    assert jnp.allclose(out, ref, atol=1e-5, rtol=1e-5)

    # Multi-tile check: exercises the 1024-lane batch tiling + partial last tile.
    B2 = 2560
    x2 = jax.random.normal(k_x2, (B2, 1), jnp.float32)
    out2 = jax.block_until_ready(simple_g_forward(None, x2, params))
    ref2 = reference_forward(None, x2, params)
    assert out2.shape == (B2, 1)
    assert jnp.allclose(out2, ref2, atol=1e-5, rtol=1e-5)

    print("KERNEL_OK")
</pallas_src>

<mosaic_0001>
module attributes {stable_mosaic.version = 11 : i64} {
  func.func @simple_g_kernel(%arg0: i32, %arg1: memref<1x8xf32, #tpu.memory_space<vmem>>, %arg2: memref<20x1xf32, #tpu.memory_space<vmem>>, %arg3: memref<20x1xf32, #tpu.memory_space<vmem>>, %arg4: memref<30x20xf32, #tpu.memory_space<vmem>>, %arg5: memref<30x1xf32, #tpu.memory_space<vmem>>, %arg6: memref<30x30xf32, #tpu.memory_space<vmem>>, %arg7: memref<30x1xf32, #tpu.memory_space<vmem>>, %arg8: memref<1x30xf32, #tpu.memory_space<vmem>>, %arg9: memref<1x1xf32, #tpu.memory_space<vmem>>, %arg10: memref<1x8xf32, #tpu.memory_space<vmem>>) attributes {dimension_semantics = [#tpu.dimension_semantics<parallel>], iteration_bounds = array<i64: 1>, scalar_prefetch = 0 : i64, scratch_operands = 0 : i64, tpu.core_type = #tpu.core_type<tc>, window_params = [{transform_indices = @transform_0, window_bounds = array<i64: 1, 8>}, {pipeline_mode = #tpu.pipeline_mode<synchronous>, transform_indices = @transform_1, window_bounds = array<i64: 20, 1>}, {pipeline_mode = #tpu.pipeline_mode<synchronous>, transform_indices = @transform_2, window_bounds = array<i64: 20, 1>}, {pipeline_mode = #tpu.pipeline_mode<synchronous>, transform_indices = @transform_3, window_bounds = array<i64: 30, 20>}, {pipeline_mode = #tpu.pipeline_mode<synchronous>, transform_indices = @transform_4, window_bounds = array<i64: 30, 1>}, {pipeline_mode = #tpu.pipeline_mode<synchronous>, transform_indices = @transform_5, window_bounds = array<i64: 30, 30>}, {pipeline_mode = #tpu.pipeline_mode<synchronous>, transform_indices = @transform_6, window_bounds = array<i64: 30, 1>}, {pipeline_mode = #tpu.pipeline_mode<synchronous>, transform_indices = @transform_7, window_bounds = array<i64: 1, 30>}, {pipeline_mode = #tpu.pipeline_mode<synchronous>, transform_indices = @transform_8, window_bounds = array<i64: 1, 1>}, {transform_indices = @transform_9, window_bounds = array<i64: 1, 8>}]} {
    %c0 = arith.constant 0 : index
    %c0_0 = arith.constant 0 : index
    %0 = vector.load %arg1[%c0, %c0_0] : memref<1x8xf32, #tpu.memory_space<vmem>>, vector<1x8xf32>
    %c0_1 = arith.constant 0 : index
    %c0_2 = arith.constant 0 : index
    %1 = vector.load %arg2[%c0_1, %c0_2] : memref<20x1xf32, #tpu.memory_space<vmem>>, vector<20x1xf32>
    %2 = vector.broadcast %1 : vector<20x1xf32> to vector<20x8xf32>
    %3 = vector.broadcast %0 : vector<1x8xf32> to vector<20x8xf32>
    %4 = arith.mulf %2, %3 : vector<20x8xf32>
    %c0_3 = arith.constant 0 : index
    %c0_4 = arith.constant 0 : index
    %5 = vector.load %arg3[%c0_3, %c0_4] : memref<20x1xf32, #tpu.memory_space<vmem>>, vector<20x1xf32>
    %6 = vector.broadcast %5 : vector<20x1xf32> to vector<20x8xf32>
    %7 = arith.addf %4, %6 : vector<20x8xf32>
    %c0_5 = arith.constant 0 : index
    %c0_6 = arith.constant 0 : index
    %8 = vector.load %arg4[%c0_5, %c0_6] : memref<30x20xf32, #tpu.memory_space<vmem>>, vector<30x20xf32>
    %cst = arith.constant dense<0.000000e+00> : vector<30x8xf32>
    %9 = tpu.matmul %8, %7, %cst {dimension_numbers = #tpu.dot_dimension_numbers<[1], [0], [0], [1], [0, 0, 1, 1], [], []>} : vector<30x20xf32>, vector<20x8xf32>, vector<30x8xf32> -> vector<30x8xf32>
    %c0_7 = arith.constant 0 : index
    %c0_8 = arith.constant 0 : index
    %10 = vector.load %arg5[%c0_7, %c0_8] : memref<30x1xf32, #tpu.memory_space<vmem>>, vector<30x1xf32>
    %11 = vector.broadcast %10 : vector<30x1xf32> to vector<30x8xf32>
    %12 = arith.addf %9, %11 : vector<30x8xf32>
    %cst_9 = arith.constant 0.000000e+00 : f32
    %13 = vector.broadcast %cst_9 : f32 to vector<30x8xf32>
    %14 = arith.maximumf %12, %13 : vector<30x8xf32>
    %c0_10 = arith.constant 0 : index
    %c0_11 = arith.constant 0 : index
    %15 = vector.load %arg6[%c0_10, %c0_11] : memref<30x30xf32, #tpu.memory_space<vmem>>, vector<30x30xf32>
    %cst_12 = arith.constant dense<0.000000e+00> : vector<30x8xf32>
    %16 = tpu.matmul %15, %14, %cst_12 {dimension_numbers = #tpu.dot_dimension_numbers<[1], [0], [0], [1], [0, 0, 1, 1], [], []>} : vector<30x30xf32>, vector<30x8xf32>, vector<30x8xf32> -> vector<30x8xf32>
    %c0_13 = arith.constant 0 : index
    %c0_14 = arith.constant 0 : index
    %17 = vector.load %arg7[%c0_13, %c0_14] : memref<30x1xf32, #tpu.memory_space<vmem>>, vector<30x1xf32>
    %18 = vector.broadcast %17 : vector<30x1xf32> to vector<30x8xf32>
    %19 = arith.addf %16, %18 : vector<30x8xf32>
    %cst_15 = arith.constant 0.000000e+00 : f32
    %20 = vector.broadcast %cst_15 : f32 to vector<30x8xf32>
    %21 = arith.maximumf %19, %20 : vector<30x8xf32>
    %c0_16 = arith.constant 0 : index
    %c0_17 = arith.constant 0 : index
    %22 = vector.load %arg8[%c0_16, %c0_17] : memref<1x30xf32, #tpu.memory_space<vmem>>, vector<1x30xf32>
    %cst_18 = arith.constant dense<0.000000e+00> : vector<1x8xf32>
    %23 = tpu.matmul %22, %21, %cst_18 {dimension_numbers = #tpu.dot_dimension_numbers<[1], [0], [0], [1], [0, 0, 1, 1], [], []>} : vector<1x30xf32>, vector<30x8xf32>, vector<1x8xf32> -> vector<1x8xf32>
    %c0_19 = arith.constant 0 : index
    %c0_20 = arith.constant 0 : index
    %24 = vector.load %arg9[%c0_19, %c0_20] : memref<1x1xf32, #tpu.memory_space<vmem>>, vector<1x1xf32>
    %25 = vector.broadcast %24 : vector<1x1xf32> to vector<1x8xf32>
    %26 = arith.addf %23, %25 : vector<1x8xf32>
    %c0_21 = arith.constant 0 : index
    %c0_22 = arith.constant 0 : index
    %27 = vector.load %arg10[%c0_21, %c0_22] : memref<1x8xf32, #tpu.memory_space<vmem>>, vector<1x8xf32>
    tpu.vector_store %arg10[%c0_21, %c0_22], %26 {strides = array<i32>} : memref<1x8xf32, #tpu.memory_space<vmem>>, vector<1x8xf32>,
    return
  }
  func.func @transform_0(%arg0: i32) -> (i32, i32) {
    %c0_i32 = arith.constant 0 : i32
    %c0_i32_0 = arith.constant 0 : i32
    return %c0_i32, %arg0 : i32, i32
  }
  func.func @transform_1(%arg0: i32) -> (i32, i32) {
    %c0_i32 = arith.constant 0 : i32
    %c0_i32_0 = arith.constant 0 : i32
    %c0_i32_1 = arith.constant 0 : i32
    return %c0_i32, %c0_i32_0 : i32, i32
  }
  func.func @transform_2(%arg0: i32) -> (i32, i32) {
    %c0_i32 = arith.constant 0 : i32
    %c0_i32_0 = arith.constant 0 : i32
    %c0_i32_1 = arith.constant 0 : i32
    return %c0_i32, %c0_i32_0 : i32, i32
  }
  func.func @transform_3(%arg0: i32) -> (i32, i32) {
    %c0_i32 = arith.constant 0 : i32
    %c0_i32_0 = arith.constant 0 : i32
    %c0_i32_1 = arith.constant 0 : i32
    return %c0_i32, %c0_i32_0 : i32, i32
  }
  func.func @transform_4(%arg0: i32) -> (i32, i32) {
    %c0_i32 = arith.constant 0 : i32
    %c0_i32_0 = arith.constant 0 : i32
    %c0_i32_1 = arith.constant 0 : i32
    return %c0_i32, %c0_i32_0 : i32, i32
  }
  func.func @transform_5(%arg0: i32) -> (i32, i32) {
    %c0_i32 = arith.constant 0 : i32
    %c0_i32_0 = arith.constant 0 : i32
    %c0_i32_1 = arith.constant 0 : i32
    return %c0_i32, %c0_i32_0 : i32, i32
  }
  func.func @transform_6(%arg0: i32) -> (i32, i32) {
    %c0_i32 = arith.constant 0 : i32
    %c0_i32_0 = arith.constant 0 : i32
    %c0_i32_1 = arith.constant 0 : i32
    return %c0_i32, %c0_i32_0 : i32, i32
  }
  func.func @transform_7(%arg0: i32) -> (i32, i32) {
    %c0_i32 = arith.constant 0 : i32
    %c0_i32_0 = arith.constant 0 : i32
    %c0_i32_1 = arith.constant 0 : i32
    return %c0_i32, %c0_i32_0 : i32, i32
  }
  func.func @transform_8(%arg0: i32) -> (i32, i32) {
    %c0_i32 = arith.constant 0 : i32
    %c0_i32_0 = arith.constant 0 : i32
    %c0_i32_1 = arith.constant 0 : i32
    return %c0_i32, %c0_i32_0 : i32, i32
  }
  func.func @transform_9(%arg0: i32) -> (i32, i32) {
    %c0_i32 = arith.constant 0 : i32
    %c0_i32_0 = arith.constant 0 : i32
    return %c0_i32, %arg0 : i32, i32
  }
}

</mosaic_0001>

<llo_original>
// kernel: tpu_custom_call.1
$region0: #{tpu_custom_call.1}
  #allocation0 [shape = 'u32[]', space=smem, size = 0x4, offset = 0x4, fixed_abs, tag = 'smem constant byte address 0x4 - core index']
  #allocation1 [shape = 'u32[72,128]{1,0:T(1,128)}', space=vmem, size = 0x9000, scoped, tag = 'internal scratch']
  #allocation2 [shape = 'f32[1,1]{1,0:T(1,128)S(1)}', space=vmem, size = 0x200, scoped, tag = 'scoped memory for tpu_custom_call.1']
  %s0 = inlined_call_operand.vmem [shape: f32[1,8], index: 0, kind: input, shape index: {}]
  %s1 = inlined_call_operand.vmem [shape: f32[20,1], index: 1, kind: input, shape index: {}]
  %s2 = inlined_call_operand.vmem [shape: f32[20,1], index: 2, kind: input, shape index: {}]
  %s3 = inlined_call_operand.vmem [shape: f32[30,20], index: 3, kind: input, shape index: {}]
  %s4 = inlined_call_operand.vmem [shape: f32[30,1], index: 4, kind: input, shape index: {}]
  %s5 = inlined_call_operand.vmem [shape: f32[30,30], index: 5, kind: input, shape index: {}]
  %s6 = inlined_call_operand.vmem [shape: f32[30,1], index: 6, kind: input, shape index: {}]
  %s7 = inlined_call_operand.vmem [shape: f32[1,30], index: 7, kind: input, shape index: {}]
  %s8 = inlined_call_operand.<no memory space> [shape: f32[1,1], index: 8, kind: input, shape index: {}]
  %s9 = inlined_call_operand.hbm [shape: f32[1,8], index: 9, kind: output, shape index: {}]
  %s10 = sld [smem:[#allocation0]]
  $region46: #{tpu_custom_call.1} parent=0
    _
  %s12 = ssub.s32 1, %s10
  %s13 = scalar_select 0, %s12, %s10
  %v14 = vstv %s8
  %15 = vst [vmem:[#allocation2] sm:$0x1] %v14
  $region1: #{tpu_custom_call.1} parent=0
    #allocation3 [shape = 'u8[512]{0}', space=vmem, size = 0x400, scoped, tag = 'output window, operand 0, single buffered']
    #allocation4 [shape = 's32[1]{0}', space=sflag, size = 0x4, scoped, tag = 'scoped memory for tpu_custom_call.1']
    %16 = vsyncpa [#allocation4], 0
    // Predicated region
    $region2: #{tpu_custom_call.1} parent=1 // pred_check
      _
    $region3: #{tpu_custom_call.1} parent=1 // pred_check_branch
      %18 = sbr.rel (0) target = $region5
    $region4: #{tpu_custom_call.1} parent=1 // pred_region
      _
    $region5: #{tpu_custom_call.1} parent=1 // pred_fallthru
      _
    // Predicated region
    $region6: #{tpu_custom_call.1} parent=1 // pred_check
      _
    $region7: #{tpu_custom_call.1} parent=1 // pred_check_branch
      %20 = sbr.rel (0) target = $region9
    $region8: #{tpu_custom_call.1} parent=1 // pred_region
      _
    $region9: #{tpu_custom_call.1} parent=1 // pred_fallthru
      _
    // Predicated region
    $region10: #{tpu_custom_call.1} parent=1 // pred_check
      _
    $region11: #{tpu_custom_call.1} parent=1 // pred_check_branch
      %22 = sbr.rel (0) target = $region13
    $region12: #{tpu_custom_call.1} parent=1 // pred_region
      _
    $region13: #{tpu_custom_call.1} parent=1 // pred_fallthru
      _
    // Predicated region
    $region14: #{tpu_custom_call.1} parent=1 // pred_check
      _
    $region15: #{tpu_custom_call.1} parent=1 // pred_check_branch
      %24 = sbr.rel (0) target = $region17
    $region16: #{tpu_custom_call.1} parent=1 // pred_region
      _
    $region17: #{tpu_custom_call.1} parent=1 // pred_fallthru
      _
    // Predicated region
    $region18: #{tpu_custom_call.1} parent=1 // pred_check
      _
    $region19: #{tpu_custom_call.1} parent=1 // pred_check_branch
      %26 = sbr.rel (0) target = $region21
    $region20: #{tpu_custom_call.1} parent=1 // pred_region
      _
    $region21: #{tpu_custom_call.1} parent=1 // pred_fallthru
      _
    // Predicated region
    $region22: #{tpu_custom_call.1} parent=1 // pred_check
      _
    $region23: #{tpu_custom_call.1} parent=1 // pred_check_branch
      %28 = sbr.rel (0) target = $region25
    $region24: #{tpu_custom_call.1} parent=1 // pred_region
      _
    $region25: #{tpu_custom_call.1} parent=1 // pred_fallthru
      _
    // Predicated region
    $region26: #{tpu_custom_call.1} parent=1 // pred_check
      _
    $region27: #{tpu_custom_call.1} parent=1 // pred_check_branch
      %30 = sbr.rel (0) target = $region29
    $region28: #{tpu_custom_call.1} parent=1 // pred_region
      _
    $region29: #{tpu_custom_call.1} parent=1 // pred_fallthru
      _
    // Predicated region
    $region30: #{tpu_custom_call.1} parent=1 // pred_check
      _
    $region31: #{tpu_custom_call.1} parent=1 // pred_check_branch
      %32 = sbr.rel (0) target = $region33
    $region32: #{tpu_custom_call.1} parent=1 // pred_region
      _
    $region33: #{tpu_custom_call.1} parent=1 // pred_fallthru
      _
    // Predicated region
    $region34: #{tpu_custom_call.1} parent=1 // pred_check
      _
    $region35: #{tpu_custom_call.1} parent=1 // pred_check_branch
      %34 = sbr.rel (0) target = $region37
    $region36: #{tpu_custom_call.1} parent=1 // pred_region
      _
    $region37: #{tpu_custom_call.1} parent=1 // pred_fallthru
      _
    %v35 = vld [vmem:[%s0] sm:$0x1]
    %v36 = vld [vmem:[%s1] sm:$0xff]
    %v37 = vld [vmem:[%s1 + $0x8] sm:$0xff]
    %v38 = vld [vmem:[%s1 + $0x10] sm:$0xf]
    %40 = vset.pattern.permute.xlu0 0
    %41 = vperm.xlu0 %40, %v36
    %v42 = vpop.permute.xlu0 %41
    %45 = vset.pattern.permute.xlu0 0
    %46 = vperm.xlu0 %45, %v37
    %v47 = vpop.permute.xlu0 %46
    %50 = vset.pattern.permute.xlu0 0
    %51 = vperm.xlu0 %50, %v38
    %v52 = vpop.permute.xlu0 %51
    %v55 = vperm.slane %v35, 0
    %v57 = vmul.f32 %v42, %v55
    %v58 = vmul.f32 %v47, %v55
    %v59 = vmul.f32 %v52, %v55
    %v60 = vld [vmem:[%s2] sm:$0xff]
    %v61 = vld [vmem:[%s2 + $0x8] sm:$0xff]
    %v62 = vld [vmem:[%s2 + $0x10] sm:$0xf]
    %64 = vset.pattern.permute.xlu0 0
    %65 = vperm.xlu0 %64, %v60
    %v66 = vpop.permute.xlu0 %65
    %69 = vset.pattern.permute.xlu0 0
    %70 = vperm.xlu0 %69, %v61
    %v71 = vpop.permute.xlu0 %70
    %74 = vset.pattern.permute.xlu0 0
    %75 = vperm.xlu0 %74, %v62
    %v76 = vpop.permute.xlu0 %75
    %v78 = vadd.f32 %v57, %v66
    %v79 = vadd.f32 %v58, %v71
    %v80 = vadd.f32 %v59, %v76
    %v81 = vld [vmem:[%s3] sm:$0xff]
    %v82 = vld [vmem:[%s3 + $0x8] sm:$0xff]
    %v83 = vld [vmem:[%s3 + $0x10] sm:$0xff]
    %v84 = vld [vmem:[%s3 + $0x18] sm:$0x3f]
    %v85 = vld [vmem:[%s4] sm:$0xff]
    %v86 = vld [vmem:[%s4 + $0x8] sm:$0xff]
    %v87 = vld [vmem:[%s4 + $0x10] sm:$0xff]
    %v88 = vld [vmem:[%s4 + $0x18] sm:$0x3f]
    %90 = vset.pattern.permute.xlu0 0
    %91 = vperm.xlu0 %90, %v85
    %v92 = vpop.permute.xlu0 %91
    %95 = vset.pattern.permute.xlu0 0
    %96 = vperm.xlu0 %95, %v86
    %v97 = vpop.permute.xlu0 %96
    %100 = vset.pattern.permute.xlu0 0
    %101 = vperm.xlu0 %100, %v87
    %v102 = vpop.permute.xlu0 %101
    %105 = vset.pattern.permute.xlu0 0
    %106 = vperm.xlu0 %105, %v88
    %v107 = vpop.permute.xlu0 %106
    %vm109 = vcmask 162816
    %v111 = vsel %vm109, %v81, 0
    %v114 = vsel %vm109, %v82, 0
    %v117 = vsel %vm109, %v83, 0
    %v120 = vsel %vm109, %v84, 0
    %vm122 = vcmask 1043456
    %v124 = vsel %vm122, %v80, 0
    %126 = vmatpush.msra.mxu0 0.0
    %127 = vmatpush.msra.mxu0 0.0
    %128 = vmatpush.msra.mxu0 0.0
    %129 = vmatpush.msra.mxu0 0.0
    %130 = vmatpush.msra.mxu0 0.0
    %131 = vmatpush.msra.mxu0 0.0
    %132 = vmatpush.msra.mxu0 0.0
    %133 = vmatpush.msra.mxu0 0.0
    %134 = vmatpush.msra.mxu0 0.0
    %135 = vmatpush.msra.mxu0 0.0
    %136 = vmatpush.msra.mxu0 0.0
    %137 = vmatpush.msra.mxu0 0.0
    %138 = vmatpush.msra.mxu0 0.0
    %139 = vmatpush.msra.mxu0 %v124
    %140 = vmatpush.msra.mxu0 %v79
    %141 = vmatpush.msra.mxu0 %v78
    %142 = vmatmul.f32.gmra.mxu0 %v111
    %v143 = vpop.f32.mrf.mxu0
    %v144 = vadd.f32 %v92, %v143
    %145 = vmatmul.f32.gmra.mxu0 %v114
    %v146 = vpop.f32.mrf.mxu0
    %v147 = vadd.f32 %v97, %v146
    %148 = vmatmul.f32.gmra.mxu0 %v117
    %v149 = vpop.f32.mrf.mxu0
    %v150 = vadd.f32 %v102, %v149
    %151 = vmatmul.f32.gmra.mxu0 %v120
    %v152 = vpop.f32.mrf.mxu0
    %v153 = vadd.f32 %v107, %v152
    %154 = vdwg.mxu0
    %v155 = vmax.f32 %v144, 0.0
    %v156 = vmax.f32 %v147, 0.0
    %v157 = vmax.f32 %v150, 0.0
    %v158 = vmax.f32 %v153, 0.0
    %v159 = vld [vmem:[%s5] sm:$0xff]
    %v160 = vld [vmem:[%s5 + $0x8] sm:$0xff]
    %v161 = vld [vmem:[%s5 + $0x10] sm:$0xff]
    %v162 = vld [vmem:[%s5 + $0x18] sm:$0x3f]
    %v163 = vld [vmem:[%s6] sm:$0xff]
    %v164 = vld [vmem:[%s6 + $0x8] sm:$0xff]
    %v165 = vld [vmem:[%s6 + $0x10] sm:$0xff]
    %v166 = vld [vmem:[%s6 + $0x18] sm:$0x3f]
    %168 = vset.pattern.permute.xlu0 0
    %169 = vperm.xlu0 %168, %v163
    %v170 = vpop.permute.xlu0 %169
    %173 = vset.pattern.permute.xlu0 0
    %174 = vperm.xlu0 %173, %v164
    %v175 = vpop.permute.xlu0 %174
    %178 = vset.pattern.permute.xlu0 0
    %179 = vperm.xlu0 %178, %v165
    %v180 = vpop.permute.xlu0 %179
    %183 = vset.pattern.permute.xlu0 0
    %184 = vperm.xlu0 %183, %v166
    %v185 = vpop.permute.xlu0 %184
    %vm187 = vcmask 244736
    %v189 = vsel %vm187, %v159, 0
    %v192 = vsel %vm187, %v160, 0
    %v195 = vsel %vm187, %v161, 0
    %v198 = vsel %vm187, %v162, 0
    %vm200 = vcmask 1045504
    %v202 = vsel %vm200, %v158, 0
    %204 = vmatpush.msra.mxu0 0.0
    %205 = vmatpush.msra.mxu0 0.0
    %206 = vmatpush.msra.mxu0 0.0
    %207 = vmatpush.msra.mxu0 0.0
    %208 = vmatpush.msra.mxu0 0.0
    %209 = vmatpush.msra.mxu0 0.0
    %210 = vmatpush.msra.mxu0 0.0
    %211 = vmatpush.msra.mxu0 0.0
    %212 = vmatpush.msra.mxu0 0.0
    %213 = vmatpush.msra.mxu0 0.0
    %214 = vmatpush.msra.mxu0 0.0
    %215 = vmatpush.msra.mxu0 0.0
    %216 = vmatpush.msra.mxu0 %v202
    %217 = vmatpush.msra.mxu0 %v157
    %218 = vmatpush.msra.mxu0 %v156
    %219 = vmatpush.msra.mxu0 %v155
    %220 = vmatmul.f32.gmra.mxu0 %v189
    %v221 = vpop.f32.mrf.mxu0
    %v222 = vadd.f32 %v170, %v221
    %223 = vmatmul.f32.gmra.mxu0 %v192
    %v224 = vpop.f32.mrf.mxu0
    %v225 = vadd.f32 %v175, %v224
    %226 = vmatmul.f32.gmra.mxu0 %v195
    %v227 = vpop.f32.mrf.mxu0
    %v228 = vadd.f32 %v180, %v227
    %229 = vmatmul.f32.gmra.mxu0 %v198
    %v230 = vpop.f32.mrf.mxu0
    %v231 = vadd.f32 %v185, %v230
    %232 = vdwg.mxu0
    %v233 = vmax.f32 %v222, 0.0
    %v234 = vmax.f32 %v225, 0.0
    %v235 = vmax.f32 %v228, 0.0
    %v236 = vmax.f32 %v231, 0.0
    %v237 = vld [vmem:[%s7] sm:$0x1]
    %v238 = vld [vmem:[#allocation2] sm:$0x1]
    %240 = vset.pattern.permute.xlu0 0
    %241 = vperm.xlu0 %240, %v238
    %v242 = vpop.permute.xlu0 %241
    %v244 = vperm.slane %v242, 0
    %v246 = vsel %vm187, %v237, 0
    %v249 = vsel %vm200, %v236, 0
    %251 = vmatpush.msra.mxu0 0.0
    %252 = vmatpush.msra.mxu0 0.0
    %253 = vmatpush.msra.mxu0 0.0
    %254 = vmatpush.msra.mxu0 0.0
    %255 = vmatpush.msra.mxu0 0.0
    %256 = vmatpush.msra.mxu0 0.0
    %257 = vmatpush.msra.mxu0 0.0
    %258 = vmatpush.msra.mxu0 0.0
    %259 = vmatpush.msra.mxu0 0.0
    %260 = vmatpush.msra.mxu0 0.0
    %261 = vmatpush.msra.mxu0 0.0
    %262 = vmatpush.msra.mxu0 0.0
    %263 = vmatpush.msra.mxu0 %v249
    %264 = vmatpush.msra.mxu0 %v235
    %265 = vmatpush.msra.mxu0 %v234
    %266 = vmatpush.msra.mxu0 %v233
    %267 = vmatmul.f32.gmra.mxu0 %v246
    %v268 = vpop.f32.mrf.mxu0
    %v269 = vadd.f32 %v244, %v268
    %270 = vdwg.mxu0
    %vm271 = vcmask 57344
    %272 = vst.msk [vmem:[#allocation3] sm:$0x1] %vm271, %v269
    // Predicated region
    $region38: #{tpu_custom_call.1} parent=1 // pred_check
      _
    $region39: #{tpu_custom_call.1} parent=1 // pred_check_branch
      %274 = sbr.rel (0) target = $region41
    $region40: #{tpu_custom_call.1} parent=1 // pred_region
      %276 = vsyncadd [#allocation4], 0
      %s278 = sshll.u32 [#allocation3], 4
      %s279 = int_to_ptr.vmem [resolvable:$true] %s278
      %s280 = sshll.u32 %s9, 4
      %s281 = int_to_ptr.hbm [resolvable:$true] %s280
      %283 = dma.vmem_to_hbm [thread:$0]  %s279, 16, %s281, [#allocation4]
    $region41: #{tpu_custom_call.1} parent=1 // pred_fallthru
      _
    // Predicated region
    $region42: #{tpu_custom_call.1} parent=1 // pred_check
      _
    $region43: #{tpu_custom_call.1} parent=1 // pred_check_branch
      %285 = sbr.rel (0) target = $region45
    $region44: #{tpu_custom_call.1} parent=1 // pred_region
      %287 = dma.done [#allocation4], 16
    $region45: #{tpu_custom_call.1} parent=1 // pred_fallthru
      _
    %288 = vsyncpa [#allocation4], 1

</llo_original>
